<compile_context>
chip_gen: v6e
topology: v6e:2x2x1
jax: 0.10.0
libtpu: 0.0.40
codegen_flags: <defaults>
</compile_context>

<pallas_src>
import numpy as np
import jax
import jax.numpy as jnp
from jax import lax
from jax.experimental import pallas as pl
from jax.experimental.pallas import tpu as pltpu

# The KV filter from the PyTorch module (divided by 12).
_KV = np.array([[-1.,  2.,  -2.,  2., -1.],
                [ 2., -6.,   8., -6.,  2.],
                [-2.,  8., -12.,  8., -2.],
                [ 2., -6.,   8., -6.,  2.],
                [-1.,  2.,  -2.,  2., -1.]], dtype=np.float32) / 12.0


def _kv_stencil(x):
    """Apply the KV/12 stencil to a row-halo'd strip.

    x : (BT, TH+4, W) f32 — rows already carry the +-2 halo (zeros at image
        boundaries); the two zero columns per side are synthesized here.
    Returns (BT, TH, W) f32.

    Rank-2 factorization  KV = a (x) r0 + b (x) r1  with
        r0 = [-1, 2, -2, 2, -1]     r1 = [2, -6, 8, -6, 2]
        a  = [ 1, 0, -2, 0,  1]     b  = [0,  1, -2, 1, 0]
    so the 5x5 conv becomes two shared horizontal 1-D passes (4 lane-shifted
    strips total, hoisted) plus a cheap vertical (sublane) combine; the /12 is
    applied once at the end.
    """
    bt, hp, w = x.shape
    th = hp - 4

    # Horizontal (lane) zero border, built in VMEM — never touches HBM.
    zc = jnp.zeros((bt, hp, 2), x.dtype)
    xp = jnp.concatenate([zc, x, zc], axis=-1)          # (BT, TH+4, W+4)

    # 4 lane-shifted strips (the dj == 2 strip is x itself), hoisted once.
    s0 = xp[:, :, 0:w]
    s1 = xp[:, :, 1:1 + w]
    s3 = xp[:, :, 3:3 + w]
    s4 = xp[:, :, 4:4 + w]

    a = s0 + s4                                         # lane-symmetric pairs
    b = s1 + s3
    u = 2.0 * b - a - 2.0 * x                           # conv with r0
    v = 2.0 * a - 6.0 * b + 8.0 * x                     # conv with r1

    out = (u[:, 0:th, :] + u[:, 4:4 + th, :]
           + v[:, 1:1 + th, :] + v[:, 3:3 + th, :]
           - 2.0 * (u[:, 2:2 + th, :] + v[:, 2:2 + th, :]))
    return out * np.float32(1.0 / 12.0)


def _hpf_kernel_single(x_ref, o_ref):
    """Whole image height in one row tile: top/bottom halos are plain zeros."""
    bt, th, w = x_ref.shape
    z2 = jnp.zeros((bt, 2, w), x_ref.dtype)
    x = jnp.concatenate([z2, x_ref[...], z2], axis=1)   # (BT, TH+4, W)
    o_ref[...] = _kv_stencil(x).astype(o_ref.dtype)


def _hpf_kernel_halo(x_ref, top_ref, bot_ref, o_ref):
    """Row-tiled path: 2-row halos come from 8-row neighbour blocks."""
    i = pl.program_id(1)
    n_rows = pl.num_programs(1)
    bt, th, w = x_ref.shape
    z2 = jnp.zeros((bt, 2, w), x_ref.dtype)
    # Neighbour blocks are clamped at image edges by the index_map; discard
    # their contents there and use zero padding instead.
    top = jnp.where(i > 0, top_ref[:, 6:8, :], z2)
    bot = jnp.where(i < n_rows - 1, bot_ref[:, 0:2, :], z2)
    x = jnp.concatenate([top, x_ref[...], bot], axis=1)  # (BT, TH+4, W)
    o_ref[...] = _kv_stencil(x).astype(o_ref.dtype)


def _choose_row_tile(H, W, target_bytes=2 << 20):
    """Largest row tile (multiple of 8, dividing H) whose f32 block fits."""
    if H * W * 4 <= target_bytes or H % 8 != 0:
        return H
    best = None
    for th in range(8, H, 8):
        if H % th == 0 and th * W * 4 <= target_bytes:
            best = th
    # TODO(synk): ragged (masked) row tiles for heights with no suitable divisor.
    return best if best is not None else H


def _choose_batch_tile(N, per_image_bytes, target_bytes=2 << 20):
    """Pack several small images per grid step to amortize per-step overhead."""
    bt = 1
    for cand in range(2, N + 1):
        if N % cand == 0 and cand * per_image_bytes <= target_bytes:
            bt = cand
    return bt


def hpf_forward(x_nchw, *, row_tile=None, batch_tile=None):
    """HPF.forward: conv2d with the fixed KV filter, stride=1, padding=2.

    Input / output are NCHW with a single channel (PyTorch convention).
    """
    N, C, H, W = x_nchw.shape
    assert C == 1, "HPF operates on single-channel inputs"

    # ---- glue (plain JAX): drop channel dim only; NO spatial padding in HBM ----
    x = x_nchw.reshape(N, H, W).astype(jnp.float32)

    TH = row_tile if row_tile is not None else _choose_row_tile(H, W)
    assert H % TH == 0 and (TH == H or TH % 8 == 0), (H, TH)
    n_rows = H // TH
    BT = (batch_tile if batch_tile is not None
          else _choose_batch_tile(N, TH * W * 4))
    assert N % BT == 0, (N, BT)
    n_batch = N // BT

    main_spec = pl.BlockSpec((BT, TH, W), lambda b, i: (b, i, 0))
    out_spec = pl.BlockSpec((BT, TH, W), lambda b, i: (b, i, 0))

    if n_rows == 1:
        kernel = _hpf_kernel_single
        in_specs = [main_spec]
        args = (x,)
        halo_bytes = 0
    else:
        th8 = TH // 8
        h8 = H // 8
        # 8-row neighbour blocks supplying the 2-row halos (clamped at edges).
        top_spec = pl.BlockSpec(
            (BT, 8, W), lambda b, i: (b, jnp.maximum(i * th8 - 1, 0), 0))
        bot_spec = pl.BlockSpec(
            (BT, 8, W), lambda b, i: (b, jnp.minimum((i + 1) * th8, h8 - 1), 0))
        kernel = _hpf_kernel_halo
        in_specs = [main_spec, top_spec, bot_spec]
        args = (x, x, x)
        halo_bytes = 2 * 8 * W * 4 * N * n_rows

    cost = pl.CostEstimate(
        flops=18 * N * H * W,            # rank-2 separable formulation
        transcendentals=0,
        bytes_accessed=4 * N * H * W * 2 + halo_bytes,
    )

    out = pl.pallas_call(
        kernel,
        out_shape=jax.ShapeDtypeStruct((N, H, W), jnp.float32),
        grid_spec=pltpu.PrefetchScalarGridSpec(
            num_scalar_prefetch=0,
            grid=(n_batch, n_rows),
            in_specs=in_specs,
            out_specs=out_spec,
        ),
        compiler_params=pltpu.CompilerParams(
            # Both axes are independent; lets the runtime shard across
            # TensorCores on v7x, neutral on v5e/v6e.
            dimension_semantics=("parallel", "parallel"),
        ),
        cost_estimate=cost,
    )(*args)

    return out.reshape(N, 1, H, W)


def reference_forward(x_nchw):
    """Pure-JAX reference mirroring F.conv2d(inp, kv_filter, stride=1, padding=2)."""
    w = jnp.asarray(_KV).reshape(1, 1, 5, 5)
    return lax.conv_general_dilated(
        x_nchw.astype(jnp.float32), w, (1, 1), [(2, 2), (2, 2)],
        dimension_numbers=("NCHW", "OIHW", "NCHW"),
        precision=lax.Precision.HIGHEST)


if __name__ == "__main__":
    # Small demo shape (single-channel, as HPF expects).
    x_small = jax.random.normal(jax.random.PRNGKey(0), (2, 1, 16, 16), jnp.float32)
    out = jax.block_until_ready(hpf_forward(x_small))
    assert out.shape == x_small.shape, out.shape
    np.testing.assert_allclose(np.asarray(out), np.asarray(reference_forward(x_small)),
                               rtol=1e-5, atol=1e-5)

    # Also exercise the halo'd row-tiled path (the code path used for large frames).
    x_tiled = jax.random.normal(jax.random.PRNGKey(1), (2, 1, 32, 32), jnp.float32)
    out2 = jax.block_until_ready(hpf_forward(x_tiled, row_tile=8))
    np.testing.assert_allclose(np.asarray(out2), np.asarray(reference_forward(x_tiled)),
                               rtol=1e-5, atol=1e-5)

    print("KERNEL_OK")
</pallas_src>

<mosaic_0001>
module attributes {stable_mosaic.version = 11 : i64} {
  func.func @_hpf_kernel_single(%arg0: i32, %arg1: i32, %arg2: memref<2x16x16xf32, #tpu.memory_space<vmem>>, %arg3: memref<2x16x16xf32, #tpu.memory_space<vmem>>) attributes {dimension_semantics = [#tpu.dimension_semantics<parallel>, #tpu.dimension_semantics<parallel>], iteration_bounds = array<i64: 1, 1>, scalar_prefetch = 0 : i64, scratch_operands = 0 : i64, tpu.core_type = #tpu.core_type<tc>, window_params = [{transform_indices = @transform_0, window_bounds = array<i64: 2, 16, 16>}, {transform_indices = @transform_1, window_bounds = array<i64: 2, 16, 16>}]} {
    %cst = arith.constant 0.000000e+00 : f32
    %0 = vector.broadcast %cst : f32 to vector<2x2x16xf32>
    %c0 = arith.constant 0 : index
    %c0_0 = arith.constant 0 : index
    %c0_1 = arith.constant 0 : index
    %1 = vector.load %arg2[%c0, %c0_0, %c0_1] : memref<2x16x16xf32, #tpu.memory_space<vmem>>, vector<2x16x16xf32>
    %2 = tpu.concatenate %0, %1, %0 in 1 : vector<2x2x16xf32>, vector<2x16x16xf32>, vector<2x2x16xf32> -> vector<2x20x16xf32>
    %cst_2 = arith.constant 0.000000e+00 : f32
    %3 = vector.broadcast %cst_2 : f32 to vector<2x20x2xf32>
    %4 = tpu.concatenate %3, %2, %3 in 2 : vector<2x20x2xf32>, vector<2x20x16xf32>, vector<2x20x2xf32> -> vector<2x20x20xf32>
    %5 = vector.extract_strided_slice %4 {offsets = [0, 0, 0], sizes = [2, 20, 16], strides = [1, 1, 1]} : vector<2x20x20xf32> to vector<2x20x16xf32>
    %6 = vector.extract_strided_slice %4 {offsets = [0, 0, 1], sizes = [2, 20, 16], strides = [1, 1, 1]} : vector<2x20x20xf32> to vector<2x20x16xf32>
    %7 = vector.extract_strided_slice %4 {offsets = [0, 0, 3], sizes = [2, 20, 16], strides = [1, 1, 1]} : vector<2x20x20xf32> to vector<2x20x16xf32>
    %8 = vector.extract_strided_slice %4 {offsets = [0, 0, 4], sizes = [2, 20, 16], strides = [1, 1, 1]} : vector<2x20x20xf32> to vector<2x20x16xf32>
    %9 = arith.addf %5, %8 : vector<2x20x16xf32>
    %10 = arith.addf %6, %7 : vector<2x20x16xf32>
    %cst_3 = arith.constant 2.000000e+00 : f32
    %11 = vector.broadcast %cst_3 : f32 to vector<2x20x16xf32>
    %12 = arith.mulf %11, %10 : vector<2x20x16xf32>
    %13 = arith.subf %12, %9 : vector<2x20x16xf32>
    %cst_4 = arith.constant 2.000000e+00 : f32
    %14 = vector.broadcast %cst_4 : f32 to vector<2x20x16xf32>
    %15 = arith.mulf %14, %2 : vector<2x20x16xf32>
    %16 = arith.subf %13, %15 : vector<2x20x16xf32>
    %cst_5 = arith.constant 2.000000e+00 : f32
    %17 = vector.broadcast %cst_5 : f32 to vector<2x20x16xf32>
    %18 = arith.mulf %17, %9 : vector<2x20x16xf32>
    %cst_6 = arith.constant 6.000000e+00 : f32
    %19 = vector.broadcast %cst_6 : f32 to vector<2x20x16xf32>
    %20 = arith.mulf %19, %10 : vector<2x20x16xf32>
    %21 = arith.subf %18, %20 : vector<2x20x16xf32>
    %cst_7 = arith.constant 8.000000e+00 : f32
    %22 = vector.broadcast %cst_7 : f32 to vector<2x20x16xf32>
    %23 = arith.mulf %22, %2 : vector<2x20x16xf32>
    %24 = arith.addf %21, %23 : vector<2x20x16xf32>
    %25 = vector.extract_strided_slice %16 {offsets = [0, 0, 0], sizes = [2, 16, 16], strides = [1, 1, 1]} : vector<2x20x16xf32> to vector<2x16x16xf32>
    %26 = vector.extract_strided_slice %16 {offsets = [0, 4, 0], sizes = [2, 16, 16], strides = [1, 1, 1]} : vector<2x20x16xf32> to vector<2x16x16xf32>
    %27 = arith.addf %25, %26 : vector<2x16x16xf32>
    %28 = vector.extract_strided_slice %24 {offsets = [0, 1, 0], sizes = [2, 16, 16], strides = [1, 1, 1]} : vector<2x20x16xf32> to vector<2x16x16xf32>
    %29 = arith.addf %27, %28 : vector<2x16x16xf32>
    %30 = vector.extract_strided_slice %24 {offsets = [0, 3, 0], sizes = [2, 16, 16], strides = [1, 1, 1]} : vector<2x20x16xf32> to vector<2x16x16xf32>
    %31 = arith.addf %29, %30 : vector<2x16x16xf32>
    %32 = vector.extract_strided_slice %16 {offsets = [0, 2, 0], sizes = [2, 16, 16], strides = [1, 1, 1]} : vector<2x20x16xf32> to vector<2x16x16xf32>
    %33 = vector.extract_strided_slice %24 {offsets = [0, 2, 0], sizes = [2, 16, 16], strides = [1, 1, 1]} : vector<2x20x16xf32> to vector<2x16x16xf32>
    %34 = arith.addf %32, %33 : vector<2x16x16xf32>
    %cst_8 = arith.constant 2.000000e+00 : f32
    %35 = vector.broadcast %cst_8 : f32 to vector<2x16x16xf32>
    %36 = arith.mulf %35, %34 : vector<2x16x16xf32>
    %37 = arith.subf %31, %36 : vector<2x16x16xf32>
    %cst_9 = arith.constant 0.0833333358 : f32
    %38 = vector.broadcast %cst_9 : f32 to vector<2x16x16xf32>
    %39 = arith.mulf %37, %38 : vector<2x16x16xf32>
    %c0_10 = arith.constant 0 : index
    %c0_11 = arith.constant 0 : index
    %c0_12 = arith.constant 0 : index
    %40 = vector.load %arg3[%c0_10, %c0_11, %c0_12] : memref<2x16x16xf32, #tpu.memory_space<vmem>>, vector<2x16x16xf32>
    tpu.vector_store %arg3[%c0_10, %c0_11, %c0_12], %39 {strides = array<i32>} : memref<2x16x16xf32, #tpu.memory_space<vmem>>, vector<2x16x16xf32>,
    return
  }
  func.func @transform_0(%arg0: i32, %arg1: i32) -> (i32, i32, i32) {
    %c0_i32 = arith.constant 0 : i32
    %c0_i32_0 = arith.constant 0 : i32
    return %arg0, %arg1, %c0_i32 : i32, i32, i32
  }
  func.func @transform_1(%arg0: i32, %arg1: i32) -> (i32, i32, i32) {
    %c0_i32 = arith.constant 0 : i32
    %c0_i32_0 = arith.constant 0 : i32
    return %arg0, %arg1, %c0_i32 : i32, i32, i32
  }
}

</mosaic_0001>

<llo_original>
// kernel: tpu_custom_call.1
$region0: #{tpu_custom_call.1}
  #allocation0 [shape = 'u32[]', space=smem, size = 0x4, offset = 0x4, fixed_abs, tag = 'smem constant byte address 0x4 - core index']
  #allocation1 [shape = 'u32[144,128]{1,0:T(1,128)}', space=vmem, size = 0x12000, scoped, tag = 'internal scratch']
  %s0 = inlined_call_operand.hbm [shape: f32[2,16,16], index: 0, kind: input, shape index: {}]
  %s1 = inlined_call_operand.hbm [shape: f32[2,16,16], index: 1, kind: output, shape index: {}]
  %s2 = sld [smem:[#allocation0]]
  $region18: #{tpu_custom_call.1} parent=0
    _
  %s4 = ssub.s32 1, %s2
  %s5 = scalar_select 0, %s4, %s2
  $region1: #{tpu_custom_call.1} parent=0
    #allocation2 [shape = 'u8[16384]{0}', space=vmem, size = 0x4000, scoped, tag = 'input window, operand 0, single buffered']
    #allocation3 [shape = 's32[1]{0}', space=sflag, size = 0x4, scoped, tag = 'scoped memory for tpu_custom_call.1']
    #allocation4 [shape = 's32[1]{0}', space=sflag, size = 0x4, scoped, tag = 'scoped memory for tpu_custom_call.1']
    #allocation5 [shape = 'u8[16384]{0}', space=vmem, size = 0x4000, scoped, tag = 'output window, operand 0, single buffered']
    %6 = vsyncpa [#allocation3], 0
    %7 = vsyncpa [#allocation4], 0
    // Predicated region
    $region2: #{tpu_custom_call.1} parent=1 // pred_check
      _
    $region3: #{tpu_custom_call.1} parent=1 // pred_check_branch
      %9 = sbr.rel (0) target = $region5
    $region4: #{tpu_custom_call.1} parent=1 // pred_region
      %s11 = ssub.s32 512, 512
      %12 = vsyncadd [#allocation3], %s11
      %s13 = sshll.u32 [#allocation2], 4
      %s14 = int_to_ptr.vmem [resolvable:$true] %s13
      %19 = dma.hbm_to_vmem [thread:$0]  %s0, 512, %s14, [#allocation3], 128, 128, 8
    $region5: #{tpu_custom_call.1} parent=1 // pred_fallthru
      _
    // Predicated region
    $region6: #{tpu_custom_call.1} parent=1 // pred_check
      _
    $region7: #{tpu_custom_call.1} parent=1 // pred_check_branch
      %21 = sbr.rel (0) target = $region9
    $region8: #{tpu_custom_call.1} parent=1 // pred_region
      %22 = dma.done [#allocation3], 512
    $region9: #{tpu_custom_call.1} parent=1 // pred_fallthru
      _
    %v23 = vld [vmem:[#allocation2] sm:$0xff]
    %v24 = vld [vmem:[#allocation2 + $0x8] sm:$0xff]
    %v25 = vld [vmem:[#allocation2 + $0x10] sm:$0xff]
    %v26 = vld [vmem:[#allocation2 + $0x18] sm:$0xff]
    %vm31 = vcmask 1041408
    %v32 = vrot.slane %v23, 6
    %v33 = vrot.slane %v24, 6
    %v34 = vsel %vm31, %v32, %v33
    %v35 = vrot.slane %v25, 6
    %v36 = vrot.slane %v26, 6
    %v37 = vsel %vm31, %v35, %v36
    %v44 = vsel %vm31, 0.0, %v32
    %v45 = vsel %vm31, 0.0, %v35
    %v46 = vsel %vm31, %v33, 0.0
    %v47 = vsel %vm31, %v36, 0.0
    %52 = vrot.lane.b32.xlu0 %v44, 2
    %v53 = vpop.permute.xlu0 %52
    %54 = vrot.lane.b32.xlu0 %v34, 2
    %v55 = vpop.permute.xlu0 %54
    %56 = vrot.lane.b32.xlu0 %v46, 2
    %v57 = vpop.permute.xlu0 %56
    %58 = vrot.lane.b32.xlu0 %v45, 2
    %v59 = vpop.permute.xlu0 %58
    %60 = vrot.lane.b32.xlu0 %v37, 2
    %v61 = vpop.permute.xlu0 %60
    %62 = vrot.lane.b32.xlu0 %v47, 2
    %v63 = vpop.permute.xlu0 %62
    %vm70 = vcmask 15360
    %v71 = vsel %vm70, 0.0, %v53
    %v72 = vsel %vm70, 0.0, %v55
    %v73 = vsel %vm70, 0.0, %v57
    %v74 = vsel %vm70, 0.0, %v59
    %v75 = vsel %vm70, 0.0, %v61
    %v76 = vsel %vm70, 0.0, %v63
    %vm77 = vcmask 146432
    %v78 = vsel %vm77, %v71, 0.0
    %v79 = vsel %vm77, %v72, 0.0
    %v80 = vsel %vm77, %v73, 0.0
    %v81 = vsel %vm77, %v74, 0.0
    %v82 = vsel %vm77, %v75, 0.0
    %v83 = vsel %vm77, %v76, 0.0
    %90 = vrot.lane.b32.xlu0 %v78, 124
    %v91 = vpop.permute.xlu0 %90
    %92 = vrot.lane.b32.xlu0 %v79, 124
    %v93 = vpop.permute.xlu0 %92
    %94 = vrot.lane.b32.xlu0 %v80, 124
    %v95 = vpop.permute.xlu0 %94
    %96 = vrot.lane.b32.xlu0 %v81, 124
    %v97 = vpop.permute.xlu0 %96
    %98 = vrot.lane.b32.xlu0 %v82, 124
    %v99 = vpop.permute.xlu0 %98
    %100 = vrot.lane.b32.xlu0 %v83, 124
    %v101 = vpop.permute.xlu0 %100
    %v108 = vadd.f32 %v78, %v91
    %v109 = vadd.f32 %v79, %v93
    %v110 = vadd.f32 %v80, %v95
    %v111 = vadd.f32 %v81, %v97
    %v112 = vadd.f32 %v82, %v99
    %v113 = vadd.f32 %v83, %v101
    %114 = vrot.lane.b32.xlu0 %v78, 126
    %v115 = vpop.permute.xlu0 %114
    %116 = vrot.lane.b32.xlu0 %v79, 126
    %v117 = vpop.permute.xlu0 %116
    %118 = vrot.lane.b32.xlu0 %v80, 126
    %v119 = vpop.permute.xlu0 %118
    %120 = vrot.lane.b32.xlu0 %v81, 126
    %v121 = vpop.permute.xlu0 %120
    %122 = vrot.lane.b32.xlu0 %v82, 126
    %v123 = vpop.permute.xlu0 %122
    %124 = vrot.lane.b32.xlu0 %v83, 126
    %v125 = vpop.permute.xlu0 %124
    %v132 = vadd.f32 %v78, %v115
    %v133 = vadd.f32 %v79, %v117
    %v134 = vadd.f32 %v80, %v119
    %v135 = vadd.f32 %v81, %v121
    %v136 = vadd.f32 %v82, %v123
    %v137 = vadd.f32 %v83, %v125
    %v138 = vmul.f32 %v132, 2.0
    %v139 = vmul.f32 %v133, 2.0
    %v140 = vmul.f32 %v134, 2.0
    %v141 = vmul.f32 %v135, 2.0
    %v142 = vmul.f32 %v136, 2.0
    %v143 = vmul.f32 %v137, 2.0
    %150 = vrot.lane.b32.xlu0 %v108, 1
    %v151 = vpop.permute.xlu0 %150
    %152 = vrot.lane.b32.xlu0 %v109, 1
    %v153 = vpop.permute.xlu0 %152
    %154 = vrot.lane.b32.xlu0 %v110, 1
    %v155 = vpop.permute.xlu0 %154
    %156 = vrot.lane.b32.xlu0 %v111, 1
    %v157 = vpop.permute.xlu0 %156
    %158 = vrot.lane.b32.xlu0 %v112, 1
    %v159 = vpop.permute.xlu0 %158
    %160 = vrot.lane.b32.xlu0 %v113, 1
    %v161 = vpop.permute.xlu0 %160
    %v168 = vsub.f32 %v138, %v151
    %v169 = vsub.f32 %v139, %v153
    %v170 = vsub.f32 %v140, %v155
    %v171 = vsub.f32 %v141, %v157
    %v172 = vsub.f32 %v142, %v159
    %v173 = vsub.f32 %v143, %v161
    %v174 = vmul.f32 %v44, 2.0
    %v175 = vmul.f32 %v34, 2.0
    %v176 = vmul.f32 %v46, 2.0
    %v177 = vmul.f32 %v45, 2.0
    %v178 = vmul.f32 %v37, 2.0
    %v179 = vmul.f32 %v47, 2.0
    %186 = vrot.lane.b32.xlu0 %v174, 1
    %v187 = vpop.permute.xlu0 %186
    %188 = vrot.lane.b32.xlu0 %v175, 1
    %v189 = vpop.permute.xlu0 %188
    %190 = vrot.lane.b32.xlu0 %v176, 1
    %v191 = vpop.permute.xlu0 %190
    %192 = vrot.lane.b32.xlu0 %v177, 1
    %v193 = vpop.permute.xlu0 %192
    %194 = vrot.lane.b32.xlu0 %v178, 1
    %v195 = vpop.permute.xlu0 %194
    %196 = vrot.lane.b32.xlu0 %v179, 1
    %v197 = vpop.permute.xlu0 %196
    %v204 = vsub.f32 %v168, %v187
    %v205 = vsub.f32 %v169, %v189
    %v206 = vsub.f32 %v170, %v191
    %v207 = vsub.f32 %v171, %v193
    %v208 = vsub.f32 %v172, %v195
    %v209 = vsub.f32 %v173, %v197
    %v210 = vmul.f32 %v108, 2.0
    %v211 = vmul.f32 %v109, 2.0
    %v212 = vmul.f32 %v110, 2.0
    %v213 = vmul.f32 %v111, 2.0
    %v214 = vmul.f32 %v112, 2.0
    %v215 = vmul.f32 %v113, 2.0
    %v216 = vmul.f32 %v132, 6.0
    %v217 = vmul.f32 %v133, 6.0
    %v218 = vmul.f32 %v134, 6.0
    %v219 = vmul.f32 %v135, 6.0
    %v220 = vmul.f32 %v136, 6.0
    %v221 = vmul.f32 %v137, 6.0
    %228 = vrot.lane.b32.xlu0 %v216, 127
    %v229 = vpop.permute.xlu0 %228
    %230 = vrot.lane.b32.xlu0 %v217, 127
    %v231 = vpop.permute.xlu0 %230
    %232 = vrot.lane.b32.xlu0 %v218, 127
    %v233 = vpop.permute.xlu0 %232
    %234 = vrot.lane.b32.xlu0 %v219, 127
    %v235 = vpop.permute.xlu0 %234
    %236 = vrot.lane.b32.xlu0 %v220, 127
    %v237 = vpop.permute.xlu0 %236
    %238 = vrot.lane.b32.xlu0 %v221, 127
    %v239 = vpop.permute.xlu0 %238
    %v246 = vsub.f32 %v210, %v229
    %v247 = vsub.f32 %v211, %v231
    %v248 = vsub.f32 %v212, %v233
    %v249 = vsub.f32 %v213, %v235
    %v250 = vsub.f32 %v214, %v237
    %v251 = vsub.f32 %v215, %v239
    %v252 = vmul.f32 %v44, 8.0
    %v253 = vmul.f32 %v34, 8.0
    %v254 = vmul.f32 %v46, 8.0
    %v255 = vmul.f32 %v45, 8.0
    %v256 = vmul.f32 %v37, 8.0
    %v257 = vmul.f32 %v47, 8.0
    %v258 = vadd.f32 %v246, %v252
    %v259 = vadd.f32 %v247, %v253
    %v260 = vadd.f32 %v248, %v254
    %v261 = vadd.f32 %v249, %v255
    %v262 = vadd.f32 %v250, %v256
    %v263 = vadd.f32 %v251, %v257
    %vm270 = vcmask 1043456
    %v271 = vrot.slane %v204, 4
    %v272 = vrot.slane %v205, 4
    %v273 = vsel %vm270, %v271, %v272
    %v274 = vrot.slane %v206, 4
    %v275 = vsel %vm270, %v272, %v274
    %v276 = vrot.slane %v207, 4
    %v277 = vrot.slane %v208, 4
    %v278 = vsel %vm270, %v276, %v277
    %v279 = vrot.slane %v209, 4
    %v280 = vsel %vm270, %v277, %v279
    %v285 = vadd.f32 %v204, %v273
    %v286 = vadd.f32 %v205, %v275
    %v287 = vadd.f32 %v207, %v278
    %v288 = vadd.f32 %v208, %v280
    %vm295 = vcmask 1046528
    %v296 = vrot.slane %v258, 1
    %v297 = vrot.slane %v259, 1
    %v298 = vsel %vm295, %v296, %v297
    %v299 = vrot.slane %v260, 1
    %v300 = vsel %vm295, %v297, %v299
    %v301 = vrot.slane %v261, 1
    %v302 = vrot.slane %v262, 1
    %v303 = vsel %vm295, %v301, %v302
    %v304 = vrot.slane %v263, 1
    %v305 = vsel %vm295, %v302, %v304
    %306 = vrot.lane.b32.xlu0 %v298, 1
    %v307 = vpop.permute.xlu0 %306
    %308 = vrot.lane.b32.xlu0 %v300, 1
    %v309 = vpop.permute.xlu0 %308
    %310 = vrot.lane.b32.xlu0 %v303, 1
    %v311 = vpop.permute.xlu0 %310
    %312 = vrot.lane.b32.xlu0 %v305, 1
    %v313 = vpop.permute.xlu0 %312
    %v318 = vadd.f32 %v285, %v307
    %v319 = vadd.f32 %v286, %v309
    %v320 = vadd.f32 %v287, %v311
    %v321 = vadd.f32 %v288, %v313
    %vm322 = vcmask 1044480
    %v323 = vrot.slane %v258, 3
    %v324 = vrot.slane %v259, 3
    %v325 = vsel %vm322, %v323, %v324
    %v326 = vrot.slane %v260, 3
    %v327 = vsel %vm322, %v324, %v326
    %v328 = vrot.slane %v261, 3
    %v329 = vrot.slane %v262, 3
    %v330 = vsel %vm322, %v328, %v329
    %v331 = vrot.slane %v263, 3
    %v332 = vsel %vm322, %v329, %v331
    %333 = vrot.lane.b32.xlu0 %v325, 1
    %v334 = vpop.permute.xlu0 %333
    %335 = vrot.lane.b32.xlu0 %v327, 1
    %v336 = vpop.permute.xlu0 %335
    %337 = vrot.lane.b32.xlu0 %v330, 1
    %v338 = vpop.permute.xlu0 %337
    %339 = vrot.lane.b32.xlu0 %v332, 1
    %v340 = vpop.permute.xlu0 %339
    %v345 = vadd.f32 %v318, %v334
    %v346 = vadd.f32 %v319, %v336
    %v347 = vadd.f32 %v320, %v338
    %v348 = vadd.f32 %v321, %v340
    %349 = vrot.lane.b32.xlu0 %v258, 1
    %v350 = vpop.permute.xlu0 %349
    %351 = vrot.lane.b32.xlu0 %v259, 1
    %v352 = vpop.permute.xlu0 %351
    %353 = vrot.lane.b32.xlu0 %v260, 1
    %v354 = vpop.permute.xlu0 %353
    %355 = vrot.lane.b32.xlu0 %v261, 1
    %v356 = vpop.permute.xlu0 %355
    %357 = vrot.lane.b32.xlu0 %v262, 1
    %v358 = vpop.permute.xlu0 %357
    %359 = vrot.lane.b32.xlu0 %v263, 1
    %v360 = vpop.permute.xlu0 %359
    %v367 = vadd.f32 %v204, %v350
    %v368 = vadd.f32 %v205, %v352
    %v369 = vadd.f32 %v206, %v354
    %v370 = vadd.f32 %v207, %v356
    %v371 = vadd.f32 %v208, %v358
    %v372 = vadd.f32 %v209, %v360
    %v373 = vmul.f32 %v367, 2.0
    %v374 = vmul.f32 %v368, 2.0
    %v375 = vmul.f32 %v369, 2.0
    %v376 = vmul.f32 %v370, 2.0
    %v377 = vmul.f32 %v371, 2.0
    %v378 = vmul.f32 %v372, 2.0
    %vm385 = vcmask 1045504
    %v386 = vrot.slane %v373, 2
    %v387 = vrot.slane %v374, 2
    %v388 = vsel %vm385, %v386, %v387
    %v389 = vrot.slane %v375, 2
    %v390 = vsel %vm385, %v387, %v389
    %v391 = vrot.slane %v376, 2
    %v392 = vrot.slane %v377, 2
    %v393 = vsel %vm385, %v391, %v392
    %v394 = vrot.slane %v378, 2
    %v395 = vsel %vm385, %v392, %v394
    %v400 = vsub.f32 %v345, %v388
    %v401 = vsub.f32 %v346, %v390
    %v402 = vsub.f32 %v347, %v393
    %v403 = vsub.f32 %v348, %v395
    %v404 = vmul.f32 %v400, 0.083333336
    %v405 = vmul.f32 %v401, 0.083333336
    %v406 = vmul.f32 %v402, 0.083333336
    %v407 = vmul.f32 %v403, 0.083333336
    %412 = vrot.lane.b32.xlu0 %v404, 127
    %v413 = vpop.permute.xlu0 %412
    %414 = vrot.lane.b32.xlu0 %v405, 127
    %v415 = vpop.permute.xlu0 %414
    %416 = vrot.lane.b32.xlu0 %v406, 127
    %v417 = vpop.permute.xlu0 %416
    %418 = vrot.lane.b32.xlu0 %v407, 127
    %v419 = vpop.permute.xlu0 %418
    %vm424 = vcmask 130048
    %425 = vst.msk [vmem:[#allocation5] sm:$0xff] %vm424, %v413
    %426 = vst.msk [vmem:[#allocation5 + $0x8] sm:$0xff] %vm424, %v415
    %427 = vst.msk [vmem:[#allocation5 + $0x10] sm:$0xff] %vm424, %v417
    %428 = vst.msk [vmem:[#allocation5 + $0x18] sm:$0xff] %vm424, %v419
    // Predicated region
    $region10: #{tpu_custom_call.1} parent=1 // pred_check
      _
    $region11: #{tpu_custom_call.1} parent=1 // pred_check_branch
      %430 = sbr.rel (0) target = $region13
    $region12: #{tpu_custom_call.1} parent=1 // pred_region
      %s432 = ssub.s32 512, 512
      %433 = vsyncadd [#allocation4], %s432
      %s434 = sshll.u32 [#allocation5], 4
      %s435 = int_to_ptr.vmem [resolvable:$true] %s434
      %440 = dma.vmem_to_hbm [thread:$0]  %s435, 512, %s1, [#allocation4], 128, 128, 8
    $region13: #{tpu_custom_call.1} parent=1 // pred_fallthru
      _
    // Predicated region
    $region14: #{tpu_custom_call.1} parent=1 // pred_check
      _
    $region15: #{tpu_custom_call.1} parent=1 // pred_check_branch
      %442 = sbr.rel (0) target = $region17
    $region16: #{tpu_custom_call.1} parent=1 // pred_region
      %443 = dma.done [#allocation4], 512
    $region17: #{tpu_custom_call.1} parent=1 // pred_fallthru
      _
    %444 = vsyncpa [#allocation3], 1
    %445 = vsyncpa [#allocation4], 1

</llo_original>
